<compile_context>
chip_gen: v5e
topology: v5e:2x2
jax: 0.10.0
libtpu: 0.0.40
codegen_flags: <defaults>
</compile_context>

<pallas_src>
import functools

import jax
import jax.numpy as jnp
from jax.experimental import pallas as pl
from jax.experimental.pallas import tpu as pltpu


def _round_up(v, m):
    return ((v + m - 1) // m) * m


# ----------------------------------------------------------------------------
# Shared kernel tail: per-group softmax + perplexity + block-diag codes matmul
# ----------------------------------------------------------------------------
def _softmax_codes_pp(noisy, cb_ref, codes_ref, pp_ref, p_full, *,
                      group, e_pad, exact_div):
    """noisy: [TN, G*Ep] f32 (logits + gumbel); pad columns sit at ~ -1e9.

    Writes:
      p_full   : [TN, G*Ep] VMEM scratch holding per-group softmax probs
      codes_ref: [TN, out_pad] = p_full @ block_diag(codebooks)
      pp_ref   : [TN, 1] per-row sum over groups of exp(entropy)
    """
    tn = noisy.shape[0]
    pp_row = jnp.zeros((tn, 1), jnp.float32)
    for g in range(group):                                    # tiny, static
        # e_pad is a multiple of 128 -> lane-aligned slice, no relayout copies.
        lg = noisy[:, g * e_pad:(g + 1) * e_pad]              # [TN, Ep]
        m = jnp.max(lg, axis=-1, keepdims=True)
        t = lg - m
        e = jnp.exp(t)                                        # pad cols -> 0
        z = jnp.sum(e, axis=-1, keepdims=True)
        inv = (1.0 / z) if exact_div else pl.reciprocal(z, approx=True)
        p = e * inv
        p_full[:, g * e_pad:(g + 1) * e_pad] = p
        # Entropy via logsumexp identity: H = log(Z) - sum_i p_i * (a_i - m).
        # Pad cols: p == 0 and (a_i - m) is finite (-1e9) -> 0 contribution.
        ent = jnp.log(z) - jnp.sum(p * t, axis=-1, keepdims=True)
        pp_row = pp_row + jnp.exp(ent)

    # Single MXU matmul against the block-diagonal codebook + one dense store.
    codes_ref[...] = jnp.dot(
        p_full[...], cb_ref[...], preferred_element_type=jnp.float32
    ).astype(codes_ref.dtype)
    pp_ref[...] = pp_row


def _quantizer_kernel_noise(x_ref, wp_ref, bp_ref, gum_ref, cb_ref,
                            codes_ref, pp_ref, p_full, *,
                            group, e_pad, exact_div):
    """Noise (gumbel) supplied from HBM; works on TPU and in interpret mode."""
    logits = jnp.dot(x_ref[...], wp_ref[...],
                     preferred_element_type=jnp.float32) + bp_ref[...]
    _softmax_codes_pp(logits + gum_ref[...], cb_ref, codes_ref, pp_ref, p_full,
                      group=group, e_pad=e_pad, exact_div=exact_div)


def _quantizer_kernel_prng(seed_ref, x_ref, wp_ref, bp_ref, cb_ref,
                           codes_ref, pp_ref, p_full, *, group, e_pad):
    """On-chip Gumbel generation (TPU hardware only; no [N, G*E] HBM stream)."""
    pltpu.prng_seed(seed_ref[0] + pl.program_id(0))
    logits = jnp.dot(x_ref[...], wp_ref[...],
                     preferred_element_type=jnp.float32) + bp_ref[...]
    bits = pltpu.prng_random_bits(logits.shape)
    frac = jnp.bitwise_and(bits, (1 << 23) - 1)               # 23 random bits
    u = (frac.astype(jnp.float32) + 0.5) * (1.0 / (1 << 23))  # u in (0, 1)
    u = jnp.minimum(u, 1.0 - 1e-6)
    gum = -jnp.log(-jnp.log(u))                               # standard Gumbel
    _softmax_codes_pp(logits + gum, cb_ref, codes_ref, pp_ref, p_full,
                      group=group, e_pad=e_pad, exact_div=False)


# ----------------------------------------------------------------------------
# Wrapper
# ----------------------------------------------------------------------------
def quantizer_forward(x, w_projT, b_proj, codebooks, *, group, entry,
                      gumbels=None, rng_key=None, seed=0,
                      use_onchip_prng=False, row_tile=512,
                      proj_dtype=jnp.float32):
    """x: [..., C_in] -> (codes [..., out_channel], loss scalar).

    gumbels given ([..., group*entry]) -> used exactly, exact divide
                                          (verification vs the reference).
    gumbels=None  -> Gumbel noise sampled on the host in the padded lane
                     layout (fast path; approx reciprocal), or generated
                     on-chip if use_onchip_prng=True (real TPU only).

    row_tile: sweep 512-2048 (cap ~1024 on v7x for the external-noise path).
    proj_dtype: set jnp.bfloat16 on v6e/v7x to halve the x HBM read
                (f32 accumulation is kept); default f32 for bit-parity.
    """
    orig_shape = x.shape
    c_in = orig_shape[-1]
    n = 1
    for s in orig_shape[:-1]:
        n *= s
    d = codebooks.shape[-1]
    out_channel = group * d
    e_pad = _round_up(entry, 128)          # lane-aligned per-group width
    out_pad = _round_up(out_channel, 128)  # lane-dense codes store

    row_tile = _round_up(max(int(row_tile), 8), 8)
    tn = min(row_tile, _round_up(n, 8))    # sublane-aligned row tile
    grid = (pl.cdiv(n, tn),)               # ragged last tile handled by Pallas

    # --- host-side (tiny) weight/bias prep --------------------------------
    x2 = x.reshape(n, c_in).astype(proj_dtype)   # NO row padding (saves a full
                                                 # read+write of the activation)

    # W^T padded so each group's `entry` columns start at g*e_pad.
    wpT = w_projT.astype(proj_dtype).reshape(c_in, group, entry)
    wpT = jnp.pad(wpT, ((0, 0), (0, 0), (0, e_pad - entry)))
    wpT = wpT.reshape(c_in, group * e_pad)
    # bias: pad columns get a FINITE -1e9 so softmax prob is exactly 0 and the
    # entropy identity sees 0 * finite = 0 (never use -inf here).
    bp = b_proj.astype(jnp.float32).reshape(group, entry)
    bp = jnp.pad(bp, ((0, 0), (0, e_pad - entry)), constant_values=-1e9)
    bp = bp.reshape(1, group * e_pad)
    # block-diagonal codebook [G*Ep, out_pad] (built once, ~few hundred KB).
    cb_bd = jnp.zeros((group * e_pad, out_pad), jnp.float32)
    for g in range(group):
        cb_bd = cb_bd.at[g * e_pad:g * e_pad + entry,
                         g * d:(g + 1) * d].set(codebooks[g].astype(jnp.float32))

    x_spec = pl.BlockSpec((tn, c_in), lambda i, *_: (i, 0))
    wp_spec = pl.BlockSpec((c_in, group * e_pad), lambda i, *_: (0, 0))
    bp_spec = pl.BlockSpec((1, group * e_pad), lambda i, *_: (0, 0))
    cb_spec = pl.BlockSpec((group * e_pad, out_pad), lambda i, *_: (0, 0))
    out_specs = [
        pl.BlockSpec((tn, out_pad), lambda i, *_: (i, 0)),
        pl.BlockSpec((tn, 1), lambda i, *_: (i, 0)),
    ]
    scratch = [pltpu.VMEM((tn, group * e_pad), jnp.float32)]   # p_full

    if use_onchip_prng:
        # TPU-hardware-only fast path: kills the [N, G*E] noise HBM stream.
        # (pltpu.prng_* have no interpret/CPU lowering, so the self-check
        #  below does not exercise this path.)
        kernel = functools.partial(_quantizer_kernel_prng,
                                   group=group, e_pad=e_pad)
        num_prefetch = 1                                  # seed lands in SMEM
        in_specs = [x_spec, wp_spec, bp_spec, cb_spec]
        args = (jnp.asarray([seed], jnp.int32), x2, wpT, bp, cb_bd)
    else:
        if gumbels is not None:
            # verification path: identical noise to the reference, exact divide.
            gum = gumbels.reshape(n, group, entry).astype(jnp.float32)
            gum = jnp.pad(gum, ((0, 0), (0, 0), (0, e_pad - entry)))
            gum = gum.reshape(n, group * e_pad)
            exact_div = True
        else:
            # fast host-noise path: sample directly in the padded lane layout
            # (no extra pad/copy op); approx reciprocal in the softmax.
            if rng_key is None:
                rng_key = jax.random.PRNGKey(seed)
            gum = jax.random.gumbel(rng_key, (n, group * e_pad), jnp.float32)
            exact_div = False
        kernel = functools.partial(_quantizer_kernel_noise, group=group,
                                   e_pad=e_pad, exact_div=exact_div)
        num_prefetch = 0
        gum_spec = pl.BlockSpec((tn, group * e_pad), lambda i, *_: (i, 0))
        in_specs = [x_spec, wp_spec, bp_spec, gum_spec, cb_spec]
        args = (x2, wpT, bp, gum, cb_bd)

    # Explicit scoped-VMEM limit: double-buffered tiles + constants + scratch,
    # with 25% slack; capped at 64 MiB so it is valid on every generation.
    vmem_bytes = 4 * tn * (2 * c_in + 3 * group * e_pad + 2 * out_pad + 2) \
        + 4 * group * e_pad * (c_in + 1 + out_pad)
    vmem_limit = min(64 * 1024 * 1024,
                     max(32 * 1024 * 1024, int(vmem_bytes * 5 // 4)))

    codes, pp_rows = pl.pallas_call(
        kernel,
        out_shape=(
            jax.ShapeDtypeStruct((n, out_pad), jnp.float32),
            jax.ShapeDtypeStruct((n, 1), jnp.float32),
        ),
        grid_spec=pltpu.PrefetchScalarGridSpec(
            num_scalar_prefetch=num_prefetch,
            grid=grid,
            in_specs=in_specs,
            out_specs=out_specs,
            scratch_shapes=scratch,
        ),
        compiler_params=pltpu.CompilerParams(
            # per-tile outputs only -> no cross-step carry -> megacore-friendly
            dimension_semantics=("parallel",),
            vmem_limit_bytes=vmem_limit,
        ),
    )(*args)

    prob_perplexity = jnp.mean(pp_rows)
    loss = 1.0 - prob_perplexity / (group * entry)
    codes = codes[:, :out_channel].reshape(*orig_shape[:-1], out_channel)
    return codes, loss


# ----------------------------------------------------------------------------
# Pure-JAX reference (mirrors the PyTorch forward, shared gumbel noise)
# ----------------------------------------------------------------------------
def reference_forward(x, w_projT, b_proj, gumbels, codebooks, *, group, entry):
    orig_shape = x.shape
    n = 1
    for s in orig_shape[:-1]:
        n *= s
    logits = x.reshape(n, -1).astype(jnp.float32) @ w_projT.astype(jnp.float32) \
        + b_proj.astype(jnp.float32)
    y = logits + gumbels.reshape(n, -1)
    y = y.reshape(n, group, entry).transpose(1, 0, 2)             # [G, N, E]
    probs = jax.nn.softmax(y, axis=-1)
    ent = -(probs * jnp.log(probs + 1e-8)).sum(-1)                # [G, N]
    pp = jnp.exp(ent).sum(0).mean()
    loss = 1.0 - pp / (group * entry)
    codes = jnp.concatenate([probs[g] @ codebooks[g] for g in range(group)],
                            axis=-1)
    out_channel = codebooks.shape[0] * codebooks.shape[-1]
    return codes.reshape(*orig_shape[:-1], out_channel), loss


# ----------------------------------------------------------------------------
# Demo / self-check
# ----------------------------------------------------------------------------
if __name__ == "__main__":
    # Small shapes consistent with the module defaults.
    batch, seq = 2, 8
    in_channel = 32
    out_channel = 16
    group = 2
    entry = 320
    code_dim = out_channel // group

    key = jax.random.PRNGKey(0)
    kx, kw, kb, kcb, kg, kn = jax.random.split(key, 6)

    x = jax.random.normal(kx, (batch, seq, in_channel), jnp.float32)
    # weight_proj: nn.Linear(in_channel, group*entry) -> pass W^T [C_in, G*E]
    w_projT = jax.random.normal(kw, (in_channel, group * entry), jnp.float32) * 0.05
    b_proj = jax.random.normal(kb, (group * entry,), jnp.float32) * 0.05
    # codebooks: group x nn.Embedding(entry, out_channel//group)
    codebooks = jax.random.normal(kcb, (group, entry, code_dim), jnp.float32)
    # proj_q exists in the PyTorch module but is unused in forward(); omitted.

    # --- path 1: shared pre-sampled gumbel noise -> check vs reference
    gumbels = jax.random.gumbel(kg, (batch, seq, group * entry), jnp.float32)
    codes, loss = quantizer_forward(x, w_projT, b_proj, codebooks,
                                    group=group, entry=entry,
                                    gumbels=gumbels, row_tile=512)
    codes = jax.block_until_ready(codes)
    loss = jax.block_until_ready(loss)

    ref_codes, ref_loss = reference_forward(x, w_projT, b_proj, gumbels,
                                            codebooks, group=group, entry=entry)
    assert codes.shape == (batch, seq, out_channel)
    assert jnp.allclose(codes, ref_codes, atol=1e-3, rtol=1e-3), "codes mismatch"
    assert jnp.allclose(loss, ref_loss, atol=1e-3, rtol=1e-3), "loss mismatch"

    # --- path 2: host-sampled noise fast path (different noise stream, so
    # only structural / range sanity checks apply)
    codes2, loss2 = quantizer_forward(x, w_projT, b_proj, codebooks,
                                      group=group, entry=entry,
                                      rng_key=kn, row_tile=512)
    codes2 = jax.block_until_ready(codes2)
    loss2 = jax.block_until_ready(loss2)
    assert codes2.shape == (batch, seq, out_channel)
    assert bool(jnp.all(jnp.isfinite(codes2))), "non-finite codes (fast path)"
    assert bool(jnp.isfinite(loss2)) and 0.0 <= float(loss2) <= 1.0, \
        "loss out of range (fast path)"

    print("KERNEL_OK")
</pallas_src>

<mosaic_0001>
module attributes {stable_mosaic.version = 11 : i64} {
  func.func @_quantizer_kernel_noise(%arg0: i32, %arg1: memref<16x32xf32, #tpu.memory_space<vmem>>, %arg2: memref<32x768xf32, #tpu.memory_space<vmem>>, %arg3: memref<1x768xf32, #tpu.memory_space<vmem>>, %arg4: memref<16x768xf32, #tpu.memory_space<vmem>>, %arg5: memref<768x128xf32, #tpu.memory_space<vmem>>, %arg6: memref<16x128xf32, #tpu.memory_space<vmem>>, %arg7: memref<16x1xf32, #tpu.memory_space<vmem>>, %arg8: memref<16x768xf32, #tpu.memory_space<vmem>>) attributes {dimension_semantics = [#tpu.dimension_semantics<parallel>], iteration_bounds = array<i64: 1>, scalar_prefetch = 0 : i64, scratch_operands = 1 : i64, tpu.core_type = #tpu.core_type<tc>, window_params = [{transform_indices = @transform_0, window_bounds = array<i64: 16, 32>}, {pipeline_mode = #tpu.pipeline_mode<synchronous>, transform_indices = @transform_1, window_bounds = array<i64: 32, 768>}, {pipeline_mode = #tpu.pipeline_mode<synchronous>, transform_indices = @transform_2, window_bounds = array<i64: 1, 768>}, {transform_indices = @transform_3, window_bounds = array<i64: 16, 768>}, {pipeline_mode = #tpu.pipeline_mode<synchronous>, transform_indices = @transform_4, window_bounds = array<i64: 768, 128>}, {transform_indices = @transform_5, window_bounds = array<i64: 16, 128>}, {transform_indices = @transform_6, window_bounds = array<i64: 16, 1>}]} {
    %c0 = arith.constant 0 : index
    %c0_0 = arith.constant 0 : index
    %0 = vector.load %arg1[%c0, %c0_0] : memref<16x32xf32, #tpu.memory_space<vmem>>, vector<16x32xf32>
    %c0_1 = arith.constant 0 : index
    %c0_2 = arith.constant 0 : index
    %1 = vector.load %arg2[%c0_1, %c0_2] : memref<32x768xf32, #tpu.memory_space<vmem>>, vector<32x768xf32>
    %cst = arith.constant dense<0.000000e+00> : vector<16x768xf32>
    %2 = tpu.matmul %0, %1, %cst {dimension_numbers = #tpu.dot_dimension_numbers<[1], [0], [0], [1], [0, 0, 1, 1], [], []>} : vector<16x32xf32>, vector<32x768xf32>, vector<16x768xf32> -> vector<16x768xf32>
    %c0_3 = arith.constant 0 : index
    %c0_4 = arith.constant 0 : index
    %3 = vector.load %arg3[%c0_3, %c0_4] : memref<1x768xf32, #tpu.memory_space<vmem>>, vector<1x768xf32>
    %4 = vector.broadcast %3 : vector<1x768xf32> to vector<16x768xf32>
    %5 = arith.addf %2, %4 : vector<16x768xf32>
    %c0_5 = arith.constant 0 : index
    %c0_6 = arith.constant 0 : index
    %6 = vector.load %arg4[%c0_5, %c0_6] : memref<16x768xf32, #tpu.memory_space<vmem>>, vector<16x768xf32>
    %7 = arith.addf %5, %6 : vector<16x768xf32>
    %cst_7 = arith.constant 0.000000e+00 : f32
    %8 = vector.broadcast %cst_7 : f32 to vector<16x1xf32>
    %9 = vector.extract_strided_slice %7 {offsets = [0, 0], sizes = [16, 384], strides = [1, 1]} : vector<16x768xf32> to vector<16x384xf32>
    %cst_8 = arith.constant dense<0xFF800000> : vector<16xf32>
    %10 = vector.multi_reduction <maximumf>, %9, %cst_8 [1] : vector<16x384xf32> to vector<16xf32>
    %11 = vector.shape_cast %10 : vector<16xf32> to vector<16x1xf32>
    %12 = vector.broadcast %11 : vector<16x1xf32> to vector<16x384xf32>
    %13 = arith.subf %9, %12 : vector<16x384xf32>
    %14 = math.exp %13 : vector<16x384xf32>
    %cst_9 = arith.constant dense<0.000000e+00> : vector<16xf32>
    %15 = vector.multi_reduction <add>, %14, %cst_9 [1] : vector<16x384xf32> to vector<16xf32>
    %16 = vector.shape_cast %15 : vector<16xf32> to vector<16x1xf32>
    %cst_10 = arith.constant 1.000000e+00 : f32
    %17 = vector.broadcast %cst_10 : f32 to vector<16x1xf32>
    %18 = arith.divf %17, %16 : vector<16x1xf32>
    %19 = vector.broadcast %18 : vector<16x1xf32> to vector<16x384xf32>
    %20 = arith.mulf %14, %19 : vector<16x384xf32>
    %c0_11 = arith.constant 0 : index
    %c0_12 = arith.constant 0 : index
    %21 = vector.load %arg8[%c0_11, %c0_12] : memref<16x768xf32, #tpu.memory_space<vmem>>, vector<16x384xf32>
    tpu.vector_store %arg8[%c0_11, %c0_12], %20 {strides = array<i32>} : memref<16x768xf32, #tpu.memory_space<vmem>>, vector<16x384xf32>,
    %22 = math.log %16 : vector<16x1xf32>
    %23 = arith.mulf %20, %13 : vector<16x384xf32>
    %cst_13 = arith.constant dense<0.000000e+00> : vector<16xf32>
    %24 = vector.multi_reduction <add>, %23, %cst_13 [1] : vector<16x384xf32> to vector<16xf32>
    %25 = vector.shape_cast %24 : vector<16xf32> to vector<16x1xf32>
    %26 = arith.subf %22, %25 : vector<16x1xf32>
    %27 = math.exp %26 : vector<16x1xf32>
    %28 = arith.addf %8, %27 : vector<16x1xf32>
    %29 = vector.extract_strided_slice %7 {offsets = [0, 384], sizes = [16, 384], strides = [1, 1]} : vector<16x768xf32> to vector<16x384xf32>
    %cst_14 = arith.constant dense<0xFF800000> : vector<16xf32>
    %30 = vector.multi_reduction <maximumf>, %29, %cst_14 [1] : vector<16x384xf32> to vector<16xf32>
    %31 = vector.shape_cast %30 : vector<16xf32> to vector<16x1xf32>
    %32 = vector.broadcast %31 : vector<16x1xf32> to vector<16x384xf32>
    %33 = arith.subf %29, %32 : vector<16x384xf32>
    %34 = math.exp %33 : vector<16x384xf32>
    %cst_15 = arith.constant dense<0.000000e+00> : vector<16xf32>
    %35 = vector.multi_reduction <add>, %34, %cst_15 [1] : vector<16x384xf32> to vector<16xf32>
    %36 = vector.shape_cast %35 : vector<16xf32> to vector<16x1xf32>
    %cst_16 = arith.constant 1.000000e+00 : f32
    %37 = vector.broadcast %cst_16 : f32 to vector<16x1xf32>
    %38 = arith.divf %37, %36 : vector<16x1xf32>
    %39 = vector.broadcast %38 : vector<16x1xf32> to vector<16x384xf32>
    %40 = arith.mulf %34, %39 : vector<16x384xf32>
    %c0_17 = arith.constant 0 : index
    %c384 = arith.constant 384 : index
    %41 = vector.load %arg8[%c0_17, %c384] : memref<16x768xf32, #tpu.memory_space<vmem>>, vector<16x384xf32>
    tpu.vector_store %arg8[%c0_17, %c384], %40 {strides = array<i32>} : memref<16x768xf32, #tpu.memory_space<vmem>>, vector<16x384xf32>,
    %42 = math.log %36 : vector<16x1xf32>
    %43 = arith.mulf %40, %33 : vector<16x384xf32>
    %cst_18 = arith.constant dense<0.000000e+00> : vector<16xf32>
    %44 = vector.multi_reduction <add>, %43, %cst_18 [1] : vector<16x384xf32> to vector<16xf32>
    %45 = vector.shape_cast %44 : vector<16xf32> to vector<16x1xf32>
    %46 = arith.subf %42, %45 : vector<16x1xf32>
    %47 = math.exp %46 : vector<16x1xf32>
    %48 = arith.addf %28, %47 : vector<16x1xf32>
    %c0_19 = arith.constant 0 : index
    %c0_20 = arith.constant 0 : index
    %49 = vector.load %arg8[%c0_19, %c0_20] : memref<16x768xf32, #tpu.memory_space<vmem>>, vector<16x768xf32>
    %c0_21 = arith.constant 0 : index
    %c0_22 = arith.constant 0 : index
    %50 = vector.load %arg5[%c0_21, %c0_22] : memref<768x128xf32, #tpu.memory_space<vmem>>, vector<768x128xf32>
    %cst_23 = arith.constant dense<0.000000e+00> : vector<16x128xf32>
    %51 = tpu.matmul %49, %50, %cst_23 {dimension_numbers = #tpu.dot_dimension_numbers<[1], [0], [0], [1], [0, 0, 1, 1], [], []>} : vector<16x768xf32>, vector<768x128xf32>, vector<16x128xf32> -> vector<16x128xf32>
    %c0_24 = arith.constant 0 : index
    %c0_25 = arith.constant 0 : index
    %52 = vector.load %arg6[%c0_24, %c0_25] : memref<16x128xf32, #tpu.memory_space<vmem>>, vector<16x128xf32>
    tpu.vector_store %arg6[%c0_24, %c0_25], %51 {strides = array<i32>} : memref<16x128xf32, #tpu.memory_space<vmem>>, vector<16x128xf32>,
    %c0_26 = arith.constant 0 : index
    %c0_27 = arith.constant 0 : index
    %53 = vector.load %arg7[%c0_26, %c0_27] : memref<16x1xf32, #tpu.memory_space<vmem>>, vector<16x1xf32>
    tpu.vector_store %arg7[%c0_26, %c0_27], %48 {strides = array<i32>} : memref<16x1xf32, #tpu.memory_space<vmem>>, vector<16x1xf32>,
    return
  }
  func.func @transform_0(%arg0: i32) -> (i32, i32) {
    %c0_i32 = arith.constant 0 : i32
    %c0_i32_0 = arith.constant 0 : i32
    return %arg0, %c0_i32 : i32, i32
  }
  func.func @transform_1(%arg0: i32) -> (i32, i32) {
    %c0_i32 = arith.constant 0 : i32
    %c0_i32_0 = arith.constant 0 : i32
    %c0_i32_1 = arith.constant 0 : i32
    return %c0_i32, %c0_i32_0 : i32, i32
  }
  func.func @transform_2(%arg0: i32) -> (i32, i32) {
    %c0_i32 = arith.constant 0 : i32
    %c0_i32_0 = arith.constant 0 : i32
    %c0_i32_1 = arith.constant 0 : i32
    return %c0_i32, %c0_i32_0 : i32, i32
  }
  func.func @transform_3(%arg0: i32) -> (i32, i32) {
    %c0_i32 = arith.constant 0 : i32
    %c0_i32_0 = arith.constant 0 : i32
    return %arg0, %c0_i32 : i32, i32
  }
  func.func @transform_4(%arg0: i32) -> (i32, i32) {
    %c0_i32 = arith.constant 0 : i32
    %c0_i32_0 = arith.constant 0 : i32
    %c0_i32_1 = arith.constant 0 : i32
    return %c0_i32, %c0_i32_0 : i32, i32
  }
  func.func @transform_5(%arg0: i32) -> (i32, i32) {
    %c0_i32 = arith.constant 0 : i32
    %c0_i32_0 = arith.constant 0 : i32
    return %arg0, %c0_i32 : i32, i32
  }
  func.func @transform_6(%arg0: i32) -> (i32, i32) {
    %c0_i32 = arith.constant 0 : i32
    %c0_i32_0 = arith.constant 0 : i32
    return %arg0, %c0_i32 : i32, i32
  }
}

</mosaic_0001>

<llo_original>
// kernel: tpu_custom_call.1
$region0: #{tpu_custom_call.1}
  #allocation0 [shape = 'u32[]', space=smem, size = 0x4, offset = 0x4, fixed_abs, tag = 'smem constant byte address 0x4 - core index']
  #allocation1 [shape = 'u32[72,128]{1,0:T(1,128)}', space=vmem, size = 0x9000, scoped, tag = 'internal scratch']
  #allocation2 [shape = 'f32[16,768]{1,0:T(8,128)}', space=vmem, size = 0xc000, scoped, tag = 'scratch operand']
  %s0 = inlined_call_operand.hbm [shape: f32[16,32], index: 0, kind: input, shape index: {}]
  %s1 = inlined_call_operand.hbm [shape: f32[32,768], index: 1, kind: input, shape index: {}]
  %s2 = inlined_call_operand.hbm [shape: f32[1,768], index: 2, kind: input, shape index: {}]
  %s3 = inlined_call_operand.hbm [shape: f32[16,768], index: 3, kind: input, shape index: {}]
  %s4 = inlined_call_operand.hbm [shape: f32[768,128], index: 4, kind: input, shape index: {}]
  %s5 = inlined_call_operand.hbm [shape: f32[16,128], index: 5, kind: output, shape index: {0}]
  %s6 = inlined_call_operand.vmem [shape: f32[16,1], index: 6, kind: output, shape index: {1}]
  %7 = xla_tuple %s5, %s6
  %s8 = sld [smem:[#allocation0]]
  $region58: #{tpu_custom_call.1} parent=0
    _
  %s10 = ssub.s32 1, %s8
  %s11 = scalar_select 0, %s10, %s8
  $region1: #{tpu_custom_call.1} parent=0
    #allocation3 [shape = 'u8[8192]{0}', space=vmem, size = 0x2000, scoped, tag = 'input window, operand 0, single buffered']
    #allocation4 [shape = 's32[1]{0}', space=sflag, size = 0x4, scoped, tag = 'scoped memory for tpu_custom_call.1']
    #allocation5 [shape = 's32[1]{0}', space=sflag, size = 0x4, scoped, tag = 'scoped memory for tpu_custom_call.1']
    #allocation6 [shape = 'u8[98304]{0}', space=vmem, size = 0x18000, scoped, tag = 'input window, operand 1, single buffered']
    #allocation7 [shape = 's32[1]{0}', space=sflag, size = 0x4, scoped, tag = 'scoped memory for tpu_custom_call.1']
    #allocation8 [shape = 'u8[3072]{0}', space=vmem, size = 0xc00, scoped, tag = 'input window, operand 2, single buffered']
    #allocation9 [shape = 'u8[49152]{0}', space=vmem, size = 0xc000, scoped, tag = 'input window, operand 3, single buffered']
    #allocation10 [shape = 's32[1]{0}', space=sflag, size = 0x4, scoped, tag = 'scoped memory for tpu_custom_call.1']
    #allocation11 [shape = 'u8[393216]{0}', space=vmem, size = 0x60000, scoped, tag = 'input window, operand 4, single buffered']
    #allocation12 [shape = 'u8[8192]{0}', space=vmem, size = 0x2000, scoped, tag = 'output window, operand 0, single buffered']
    %12 = vsyncpa [#allocation4], 0
    %13 = vsyncpa [#allocation7], 0
    %14 = vsyncpa [#allocation10], 0
    %15 = vsyncpa [#allocation5], 0
    // Predicated region
    $region2: #{tpu_custom_call.1} parent=1 // pred_check
      _
    $region3: #{tpu_custom_call.1} parent=1 // pred_check_branch
      %17 = sbr.rel (0) target = $region5
    $region4: #{tpu_custom_call.1} parent=1 // pred_region
      %19 = vsyncadd [#allocation4], 0
      %s20 = sshll.u32 %s0, 4
      %s21 = int_to_ptr.hbm [resolvable:$true] %s20
      %s22 = sshll.u32 [#allocation3], 4
      %s23 = int_to_ptr.vmem [resolvable:$true] %s22
      %28 = dma.hbm_to_vmem [thread:$0]  %s21, 256, %s23, [#allocation4], 128, 128, 8
    $region5: #{tpu_custom_call.1} parent=1 // pred_fallthru
      _
    // Predicated region
    $region6: #{tpu_custom_call.1} parent=1 // pred_check
      _
    $region7: #{tpu_custom_call.1} parent=1 // pred_check_branch
      %30 = sbr.rel (0) target = $region9
    $region8: #{tpu_custom_call.1} parent=1 // pred_region
      %32 = vsyncadd [#allocation7], 0
      %s33 = sshll.u32 %s1, 4
      %s34 = int_to_ptr.hbm [resolvable:$true] %s33
      %s35 = sshll.u32 [#allocation6], 4
      %s36 = int_to_ptr.vmem [resolvable:$true] %s35
      %41 = dma.hbm_to_vmem [thread:$0]  %s34, 3072, %s36, [#allocation7], 768, 768, 48
    $region9: #{tpu_custom_call.1} parent=1 // pred_fallthru
      _
    // Predicated region
    $region10: #{tpu_custom_call.1} parent=1 // pred_check
      _
    $region11: #{tpu_custom_call.1} parent=1 // pred_check_branch
      %43 = sbr.rel (0) target = $region13
    $region12: #{tpu_custom_call.1} parent=1 // pred_region
      %45 = vsyncadd [#allocation7], 0
      %s47 = sshll.u32 %s2, 4
      %s48 = int_to_ptr.hbm [resolvable:$true] %s47
      %s49 = sshll.u32 [#allocation8], 4
      %s50 = int_to_ptr.vmem [resolvable:$true] %s49
      %52 = dma.hbm_to_vmem [thread:$0]  %s48, 96, %s50, [#allocation7]
    $region13: #{tpu_custom_call.1} parent=1 // pred_fallthru
      _
    // Predicated region
    $region14: #{tpu_custom_call.1} parent=1 // pred_check
      _
    $region15: #{tpu_custom_call.1} parent=1 // pred_check_branch
      %54 = sbr.rel (0) target = $region17
    $region16: #{tpu_custom_call.1} parent=1 // pred_region
      %56 = vsyncadd [#allocation10], 0
      %s57 = sshll.u32 %s3, 4
      %s58 = int_to_ptr.hbm [resolvable:$true] %s57
      %s59 = sshll.u32 [#allocation9], 4
      %s60 = int_to_ptr.vmem [resolvable:$true] %s59
      %65 = dma.hbm_to_vmem [thread:$0]  %s58, 1536, %s60, [#allocation10], 768, 768, 48
    $region17: #{tpu_custom_call.1} parent=1 // pred_fallthru
      _
    // Predicated region
    $region18: #{tpu_custom_call.1} parent=1 // pred_check
      _
    $region19: #{tpu_custom_call.1} parent=1 // pred_check_branch
      %67 = sbr.rel (0) target = $region21
    $region20: #{tpu_custom_call.1} parent=1 // pred_region
      %69 = vsyncadd [#allocation10], 0
      %s70 = sshll.u32 %s4, 4
      %s71 = int_to_ptr.hbm [resolvable:$true] %s70
      %s72 = sshll.u32 [#allocation11], 4
      %s73 = int_to_ptr.vmem [resolvable:$true] %s72
      %78 = dma.hbm_to_vmem [thread:$0]  %s71, 12288, %s73, [#allocation10], 128, 128, 8
    $region21: #{tpu_custom_call.1} parent=1 // pred_fallthru
      _
    // Predicated region
    $region22: #{tpu_custom_call.1} parent=1 // pred_check
      _
    $region23: #{tpu_custom_call.1} parent=1 // pred_check_branch
      %80 = sbr.rel (0) target = $region25
    $region24: #{tpu_custom_call.1} parent=1 // pred_region
      %82 = dma.done [#allocation4], 256
    $region25: #{tpu_custom_call.1} parent=1 // pred_fallthru
      _
    // Predicated region
    $region26: #{tpu_custom_call.1} parent=1 // pred_check
      _
    $region27: #{tpu_custom_call.1} parent=1 // pred_check_branch
      %84 = sbr.rel (0) target = $region29
    $region28: #{tpu_custom_call.1} parent=1 // pred_region
      %86 = dma.done [#allocation7], 3072
    $region29: #{tpu_custom_call.1} parent=1 // pred_fallthru
      _
    // Predicated region
    $region30: #{tpu_custom_call.1} parent=1 // pred_check
      _
    $region31: #{tpu_custom_call.1} parent=1 // pred_check_branch
      %88 = sbr.rel (0) target = $region33
    $region32: #{tpu_custom_call.1} parent=1 // pred_region
      %90 = dma.done [#allocation7], 96
    $region33: #{tpu_custom_call.1} parent=1 // pred_fallthru
      _
    // Predicated region
    $region34: #{tpu_custom_call.1} parent=1 // pred_check
      _
    $region35: #{tpu_custom_call.1} parent=1 // pred_check_branch
      %92 = sbr.rel (0) target = $region37
    $region36: #{tpu_custom_call.1} parent=1 // pred_region
      %94 = dma.done [#allocation10], 1536
    $region37: #{tpu_custom_call.1} parent=1 // pred_fallthru
      _
    // Predicated region
    $region38: #{tpu_custom_call.1} parent=1 // pred_check
      _
    $region39: #{tpu_custom_call.1} parent=1 // pred_check_branch
      %96 = sbr.rel (0) target = $region41
    $region40: #{tpu_custom_call.1} parent=1 // pred_region
      %98 = dma.done [#allocation10], 12288
    $region41: #{tpu_custom_call.1} parent=1 // pred_fallthru
      _
    %v99 = vld [vmem:[#allocation3] sm:$0xff]
    %v100 = vld [vmem:[#allocation3 + $0x8] sm:$0xff]
    %v101 = vld [vmem:[#allocation6] sm:$0xff]
    %v102 = vld [vmem:[#allocation6 + $0x8] sm:$0xff]
    %v103 = vld [vmem:[#allocation6 + $0x10] sm:$0xff]
    %v104 = vld [vmem:[#allocation6 + $0x18] sm:$0xff]
    %v105 = vld [vmem:[#allocation6 + $0x20] sm:$0xff]
    %v106 = vld [vmem:[#allocation6 + $0x28] sm:$0xff]
    %v107 = vld [vmem:[#allocation6 + $0x30] sm:$0xff]
    %v108 = vld [vmem:[#allocation6 + $0x38] sm:$0xff]
    %v109 = vld [vmem:[#allocation6 + $0x40] sm:$0xff]
    %v110 = vld [vmem:[#allocation6 + $0x48] sm:$0xff]
    %v111 = vld [vmem:[#allocation6 + $0x50] sm:$0xff]
    %v112 = vld [vmem:[#allocation6 + $0x58] sm:$0xff]
    %v113 = vld [vmem:[#allocation6 + $0x60] sm:$0xff]
    %v114 = vld [vmem:[#allocation6 + $0x68] sm:$0xff]
    %v115 = vld [vmem:[#allocation6 + $0x70] sm:$0xff]
    %v116 = vld [vmem:[#allocation6 + $0x78] sm:$0xff]
    %v117 = vld [vmem:[#allocation6 + $0x80] sm:$0xff]
    %v118 = vld [vmem:[#allocation6 + $0x88] sm:$0xff]
    %v119 = vld [vmem:[#allocation6 + $0x90] sm:$0xff]
    %v120 = vld [vmem:[#allocation6 + $0x98] sm:$0xff]
    %v121 = vld [vmem:[#allocation6 + $0xa0] sm:$0xff]
    %v122 = vld [vmem:[#allocation6 + $0xa8] sm:$0xff]
    %v123 = vld [vmem:[#allocation6 + $0xb0] sm:$0xff]
    %v124 = vld [vmem:[#allocation6 + $0xb8] sm:$0xff]
    %v125 = vld [vmem:[#allocation8] sm:$0x3f]
    %v127 = vperm.slane %v125, 0
    %v128 = vperm.slane %v125, 1
    %v129 = vperm.slane %v125, 2
    %v130 = vperm.slane %v125, 3
    %v131 = vperm.slane %v125, 4
    %v132 = vperm.slane %v125, 5
    %vm139 = vcmask 261120
    %v141 = vsel %vm139, %v99, 0
    %v144 = vsel %vm139, %v100, 0
    %146 = vmatpush.msra.mxu0 0.0
    %147 = vmatpush.msra.mxu0 0.0
    %148 = vmatpush.msra.mxu0 0.0
    %149 = vmatpush.msra.mxu0 0.0
    %150 = vmatpush.msra.mxu0 0.0
    %151 = vmatpush.msra.mxu0 0.0
    %152 = vmatpush.msra.mxu0 0.0
    %153 = vmatpush.msra.mxu0 0.0
    %154 = vmatpush.msra.mxu0 0.0
    %155 = vmatpush.msra.mxu0 0.0
    %156 = vmatpush.msra.mxu0 0.0
    %157 = vmatpush.msra.mxu0 0.0
    %158 = vmatpush.msra.mxu0 %v119
    %159 = vmatpush.msra.mxu0 %v113
    %160 = vmatpush.msra.mxu0 %v107
    %161 = vmatpush.msra.mxu0 %v101
    %162 = vmatmul.f32.gmra.mxu0 %v141
    %v163 = vpop.f32.mrf.mxu0
    %v164 = vadd.f32 %v127, %v163
    %165 = vmatmul.f32.gmra.mxu0 %v144
    %v166 = vpop.f32.mrf.mxu0
    %v167 = vadd.f32 %v127, %v166
    %168 = vdwg.mxu0
    %169 = vmatpush.msra.mxu0 0.0
    %170 = vmatpush.msra.mxu0 0.0
    %171 = vmatpush.msra.mxu0 0.0
    %172 = vmatpush.msra.mxu0 0.0
    %173 = vmatpush.msra.mxu0 0.0
    %174 = vmatpush.msra.mxu0 0.0
    %175 = vmatpush.msra.mxu0 0.0
    %176 = vmatpush.msra.mxu0 0.0
    %177 = vmatpush.msra.mxu0 0.0
    %178 = vmatpush.msra.mxu0 0.0
    %179 = vmatpush.msra.mxu0 0.0
    %180 = vmatpush.msra.mxu0 0.0
    %181 = vmatpush.msra.mxu0 %v120
    %182 = vmatpush.msra.mxu0 %v114
    %183 = vmatpush.msra.mxu0 %v108
    %184 = vmatpush.msra.mxu0 %v102
    %185 = vmatmul.f32.gmra.mxu0 %v141
    %v186 = vpop.f32.mrf.mxu0
    %v187 = vadd.f32 %v128, %v186
    %188 = vmatmul.f32.gmra.mxu0 %v144
    %v189 = vpop.f32.mrf.mxu0
    %v190 = vadd.f32 %v128, %v189
    %191 = vdwg.mxu0
    %192 = vmatpush.msra.mxu0 0.0
    %193 = vmatpush.msra.mxu0 0.0
    %194 = vmatpush.msra.mxu0 0.0
    %195 = vmatpush.msra.mxu0 0.0
    %196 = vmatpush.msra.mxu0 0.0
    %197 = vmatpush.msra.mxu0 0.0
    %198 = vmatpush.msra.mxu0 0.0
    %199 = vmatpush.msra.mxu0 0.0
    %200 = vmatpush.msra.mxu0 0.0
    %201 = vmatpush.msra.mxu0 0.0
    %202 = vmatpush.msra.mxu0 0.0
    %203 = vmatpush.msra.mxu0 0.0
    %204 = vmatpush.msra.mxu0 %v121
    %205 = vmatpush.msra.mxu0 %v115
    %206 = vmatpush.msra.mxu0 %v109
    %207 = vmatpush.msra.mxu0 %v103
    %208 = vmatmul.f32.gmra.mxu0 %v141
    %v209 = vpop.f32.mrf.mxu0
    %v210 = vadd.f32 %v129, %v209
    %211 = vmatmul.f32.gmra.mxu0 %v144
    %v212 = vpop.f32.mrf.mxu0
    %v213 = vadd.f32 %v129, %v212
    %214 = vdwg.mxu0
    %215 = vmatpush.msra.mxu0 0.0
    %216 = vmatpush.msra.mxu0 0.0
    %217 = vmatpush.msra.mxu0 0.0
    %218 = vmatpush.msra.mxu0 0.0
    %219 = vmatpush.msra.mxu0 0.0
    %220 = vmatpush.msra.mxu0 0.0
    %221 = vmatpush.msra.mxu0 0.0
    %222 = vmatpush.msra.mxu0 0.0
    %223 = vmatpush.msra.mxu0 0.0
    %224 = vmatpush.msra.mxu0 0.0
    %225 = vmatpush.msra.mxu0 0.0
    %226 = vmatpush.msra.mxu0 0.0
    %227 = vmatpush.msra.mxu0 %v122
    %228 = vmatpush.msra.mxu0 %v116
    %229 = vmatpush.msra.mxu0 %v110
    %230 = vmatpush.msra.mxu0 %v104
    %231 = vmatmul.f32.gmra.mxu0 %v141
    %v232 = vpop.f32.mrf.mxu0
    %v233 = vadd.f32 %v130, %v232
    %234 = vmatmul.f32.gmra.mxu0 %v144
    %v235 = vpop.f32.mrf.mxu0
    %v236 = vadd.f32 %v130, %v235
    %237 = vdwg.mxu0
    %238 = vmatpush.msra.mxu0 0.0
    %239 = vmatpush.msra.mxu0 0.0
    %240 = vmatpush.msra.mxu0 0.0
    %241 = vmatpush.msra.mxu0 0.0
    %242 = vmatpush.msra.mxu0 0.0
    %243 = vmatpush.msra.mxu0 0.0
    %244 = vmatpush.msra.mxu0 0.0
    %245 = vmatpush.msra.mxu0 0.0
    %246 = vmatpush.msra.mxu0 0.0
    %247 = vmatpush.msra.mxu0 0.0
    %248 = vmatpush.msra.mxu0 0.0
    %249 = vmatpush.msra.mxu0 0.0
    %250 = vmatpush.msra.mxu0 %v123
    %251 = vmatpush.msra.mxu0 %v117
    %252 = vmatpush.msra.mxu0 %v111
    %253 = vmatpush.msra.mxu0 %v105
    %254 = vmatmul.f32.gmra.mxu0 %v141
    %v255 = vpop.f32.mrf.mxu0
    %v256 = vadd.f32 %v131, %v255
    %257 = vmatmul.f32.gmra.mxu0 %v144
    %v258 = vpop.f32.mrf.mxu0
    %v259 = vadd.f32 %v131, %v258
    %260 = vdwg.mxu0
    %261 = vmatpush.msra.mxu0 0.0
    %262 = vmatpush.msra.mxu0 0.0
    %263 = vmatpush.msra.mxu0 0.0
    %264 = vmatpush.msra.mxu0 0.0
    %265 = vmatpush.msra.mxu0 0.0
    %266 = vmatpush.msra.mxu0 0.0
    %267 = vmatpush.msra.mxu0 0.0
    %268 = vmatpush.msra.mxu0 0.0
    %269 = vmatpush.msra.mxu0 0.0
    %270 = vmatpush.msra.mxu0 0.0
    %271 = vmatpush.msra.mxu0 0.0
    %272 = vmatpush.msra.mxu0 0.0
    %273 = vmatpush.msra.mxu0 %v124
    %274 = vmatpush.msra.mxu0 %v118
    %275 = vmatpush.msra.mxu0 %v112
    %276 = vmatpush.msra.mxu0 %v106
    %277 = vmatmul.f32.gmra.mxu0 %v141
    %v278 = vpop.f32.mrf.mxu0
    %v279 = vadd.f32 %v132, %v278
    %280 = vmatmul.f32.gmra.mxu0 %v144
    %v281 = vpop.f32.mrf.mxu0
    %v282 = vadd.f32 %v132, %v281
    %283 = vdwg.mxu0
    %v284 = vld [vmem:[#allocation9] sm:$0xff]
    %v285 = vld [vmem:[#allocation9 + $0x8] sm:$0xff]
    %v286 = vld [vmem:[#allocation9 + $0x10] sm:$0xff]
    %v287 = vld [vmem:[#allocation9 + $0x18] sm:$0xff]
    %v288 = vld [vmem:[#allocation9 + $0x20] sm:$0xff]
    %v289 = vld [vmem:[#allocation9 + $0x28] sm:$0xff]
    %v290 = vld [vmem:[#allocation9 + $0x30] sm:$0xff]
    %v291 = vld [vmem:[#allocation9 + $0x38] sm:$0xff]
    %v292 = vld [vmem:[#allocation9 + $0x40] sm:$0xff]
    %v293 = vld [vmem:[#allocation9 + $0x48] sm:$0xff]
    %v294 = vld [vmem:[#allocation9 + $0x50] sm:$0xff]
    %v295 = vld [vmem:[#allocation9 + $0x58] sm:$0xff]
    %v296 = vadd.f32 %v164, %v284
    %v297 = vadd.f32 %v187, %v285
    %v298 = vadd.f32 %v210, %v286
    %v299 = vadd.f32 %v233, %v287
    %v300 = vadd.f32 %v256, %v288
    %v301 = vadd.f32 %v279, %v289
    %v302 = vadd.f32 %v167, %v290
    %v303 = vadd.f32 %v190, %v291
    %v304 = vadd.f32 %v213, %v292
    %v305 = vadd.f32 %v236, %v293
    %v306 = vadd.f32 %v259, %v294
    %v307 = vadd.f32 %v282, %v295
    %v308 = vmax.f32 %v296, %v298
    %v309 = vmax.f32 %v308, %v297
    %310 = vmax.xlane.f32.xlu0 %v309
    %v311 = vpop.xlane.xlu0 %310
    %v312 = vmax.f32 %v302, %v304
    %v313 = vmax.f32 %v312, %v303
    %314 = vmax.xlane.f32.xlu0 %v313
    %v315 = vpop.xlane.xlu0 %314
    %v316 = vsub.f32 %v296, %v311
    %v317 = vsub.f32 %v297, %v311
    %v318 = vsub.f32 %v298, %v311
    %v319 = vsub.f32 %v302, %v315
    %v320 = vsub.f32 %v303, %v315
    %v321 = vsub.f32 %v304, %v315
    %v322 = vmul.f32 %v316, 1.442695
    %v323 = vpow.pop %v322
    %v324 = vmul.f32 %v317, 1.442695
    %v325 = vpow.pop %v324
    %v326 = vmul.f32 %v318, 1.442695
    %v327 = vpow.pop %v326
    %v328 = vmul.f32 %v319, 1.442695
    %v329 = vpow.pop %v328
    %v330 = vmul.f32 %v320, 1.442695
    %v331 = vpow.pop %v330
    %v332 = vmul.f32 %v321, 1.442695
    %v333 = vpow.pop %v332
    %v334 = vadd.f32 %v323, %v325
    %v335 = vadd.f32 %v334, %v327
    %336 = vadd.xlane.f32.xlu0 %v335
    %v337 = vpop.xlane.xlu0 %336
    %v338 = vadd.f32 %v329, %v331
    %v339 = vadd.f32 %v338, %v333
    %340 = vadd.xlane.f32.xlu0 %v339
    %v341 = vpop.xlane.xlu0 %340
    %v342 = vrcp.pop %v337
    %v343 = vmul.f32 %v337, %v342
    %v344 = vsub.f32 1.0, %v343
    %v345 = vmul.f32 %v342, %v344
    %v346 = vadd.f32 %v342, %v345
    %vm347 = vweird.f32 %v337
    %vm348 = vweird.f32 %v342
    %vm349 = vmor %vm347, %vm348
    %v350 = vsel %vm349, %v342, %v346
    %v351 = vand.u32 2147483647, %v337
    %vm352 = vcmp.eq.f32.partialorder %v351, 8.507059e+37
    %v353 = vand.u32 %v337, 2147483648
    %v354 = vor.u32 1.1754944e-38, %v353
    %v355 = vsel %vm352, %v354, %v350
    %v356 = vmul.f32 1.0, %v355
    %v357 = vrcp.pop %v341
    %v358 = vmul.f32 %v341, %v357
    %v359 = vsub.f32 1.0, %v358
    %v360 = vmul.f32 %v357, %v359
    %v361 = vadd.f32 %v357, %v360
    %vm362 = vweird.f32 %v341
    %vm363 = vweird.f32 %v357
    %vm364 = vmor %vm362, %vm363
    %v365 = vsel %vm364, %v357, %v361
    %v366 = vand.u32 2147483647, %v341
    %vm367 = vcmp.eq.f32.partialorder %v366, 8.507059e+37
    %v368 = vand.u32 %v341, 2147483648
    %v369 = vor.u32 1.1754944e-38, %v368
    %v370 = vsel %vm367, %v369, %v365
    %v371 = vmul.f32 1.0, %v370
    %v372 = vmul.f32 %v323, %v356
    %v373 = vmul.f32 %v325, %v356
    %v374 = vmul.f32 %v327, %v356
    %v375 = vmul.f32 %v329, %v371
    %v376 = vmul.f32 %v331, %v371
    %v377 = vmul.f32 %v333, %v371
    %378 = vst [vmem:[#allocation2] sm:$0xff] %v372
    %379 = vst [vmem:[#allocation2 + $0x8] sm:$0xff] %v373
    %380 = vst [vmem:[#allocation2 + $0x10] sm:$0xff] %v374
    %381 = vst [vmem:[#allocation2 + $0x30] sm:$0xff] %v375
    %382 = vst [vmem:[#allocation2 + $0x38] sm:$0xff] %v376
    %383 = vst [vmem:[#allocation2 + $0x40] sm:$0xff] %v377
    %v384 = vlog2.pop %v337
    %v385 = vmul.f32 %v384, 0.6931472
    %v386 = vlog2.pop %v341
    %v387 = vmul.f32 %v386, 0.6931472
    %v388 = vmul.f32 %v372, %v316
    %v389 = vmul.f32 %v373, %v317
    %v390 = vmul.f32 %v374, %v318
    %v391 = vmul.f32 %v375, %v319
    %v392 = vmul.f32 %v376, %v320
    %v393 = vmul.f32 %v377, %v321
    %v394 = vadd.f32 %v388, %v389
    %v395 = vadd.f32 %v394, %v390
    %396 = vadd.xlane.f32.xlu0 %v395
    %v397 = vpop.xlane.xlu0 %396
    %v398 = vadd.f32 %v391, %v392
    %v399 = vadd.f32 %v398, %v393
    %400 = vadd.xlane.f32.xlu0 %v399
    %v401 = vpop.xlane.xlu0 %400
    %v402 = vsub.f32 %v385, %v397
    %v403 = vsub.f32 %v387, %v401
    %v404 = vmul.f32 %v402, 1.442695
    %v405 = vpow.pop %v404
    %v406 = vmul.f32 %v403, 1.442695
    %v407 = vpow.pop %v406
    %v408 = vadd.f32 %v405, 0.0
    %v409 = vadd.f32 %v407, 0.0
    %v410 = vmax.f32 %v299, %v301
    %v411 = vmax.f32 %v410, %v300
    %412 = vmax.xlane.f32.xlu0 %v411
    %v413 = vpop.xlane.xlu0 %412
    %v414 = vmax.f32 %v305, %v307
    %v415 = vmax.f32 %v414, %v306
    %416 = vmax.xlane.f32.xlu0 %v415
    %v417 = vpop.xlane.xlu0 %416
    %v418 = vsub.f32 %v299, %v413
    %v419 = vsub.f32 %v300, %v413
    %v420 = vsub.f32 %v301, %v413
    %v421 = vsub.f32 %v305, %v417
    %v422 = vsub.f32 %v306, %v417
    %v423 = vsub.f32 %v307, %v417
    %v424 = vmul.f32 %v418, 1.442695
    %v425 = vpow.pop %v424
    %v426 = vmul.f32 %v419, 1.442695
    %v427 = vpow.pop %v426
    %v428 = vmul.f32 %v420, 1.442695
    %v429 = vpow.pop %v428
    %v430 = vmul.f32 %v421, 1.442695
    %v431 = vpow.pop %v430
    %v432 = vmul.f32 %v422, 1.442695
    %v433 = vpow.pop %v432
    %v434 = vmul.f32 %v423, 1.442695
    %v435 = vpow.pop %v434
    %v436 = vadd.f32 %v425, %v427
    %v437 = vadd.f32 %v436, %v429
    %438 = vadd.xlane.f32.xlu0 %v437
    %v439 = vpop.xlane.xlu0 %438
    %v440 = vadd.f32 %v431, %v433
    %v441 = vadd.f32 %v440, %v435
    %442 = vadd.xlane.f32.xlu0 %v441
    %v443 = vpop.xlane.xlu0 %442
    %v444 = vrcp.pop %v439
    %v445 = vmul.f32 %v439, %v444
    %v446 = vsub.f32 1.0, %v445
    %v447 = vmul.f32 %v444, %v446
    %v448 = vadd.f32 %v444, %v447
    %vm449 = vweird.f32 %v439
    %vm450 = vweird.f32 %v444
    %vm451 = vmor %vm449, %vm450
    %v452 = vsel %vm451, %v444, %v448
    %v453 = vand.u32 2147483647, %v439
    %vm454 = vcmp.eq.f32.partialorder %v453, 8.507059e+37
    %v455 = vand.u32 %v439, 2147483648
    %v456 = vor.u32 1.1754944e-38, %v455
    %v457 = vsel %vm454, %v456, %v452
    %v458 = vmul.f32 1.0, %v457
    %v459 = vrcp.pop %v443
    %v460 = vmul.f32 %v443, %v459
    %v461 = vsub.f32 1.0, %v460
    %v462 = vmul.f32 %v459, %v461
    %v463 = vadd.f32 %v459, %v462
    %vm464 = vweird.f32 %v443
    %vm465 = vweird.f32 %v459
    %vm466 = vmor %vm464, %vm465
    %v467 = vsel %vm466, %v459, %v463
    %v468 = vand.u32 2147483647, %v443
    %vm469 = vcmp.eq.f32.partialorder %v468, 8.507059e+37
    %v470 = vand.u32 %v443, 2147483648
    %v471 = vor.u32 1.1754944e-38, %v470
    %v472 = vsel %vm469, %v471, %v467
    %v473 = vmul.f32 1.0, %v472
    %v474 = vmul.f32 %v425, %v458
    %v475 = vmul.f32 %v427, %v458
    %v476 = vmul.f32 %v429, %v458
    %v477 = vmul.f32 %v431, %v473
    %v478 = vmul.f32 %v433, %v473
    %v479 = vmul.f32 %v435, %v473
    %480 = vst [vmem:[#allocation2 + $0x18] sm:$0xff] %v474
    %481 = vst [vmem:[#allocation2 + $0x20] sm:$0xff] %v475
    %482 = vst [vmem:[#allocation2 + $0x28] sm:$0xff] %v476
    %483 = vst [vmem:[#allocation2 + $0x48] sm:$0xff] %v477
    %484 = vst [vmem:[#allocation2 + $0x50] sm:$0xff] %v478
    %485 = vst [vmem:[#allocation2 + $0x58] sm:$0xff] %v479
    %v486 = vlog2.pop %v439
    %v487 = vmul.f32 %v486, 0.6931472
    %v488 = vlog2.pop %v443
    %v489 = vmul.f32 %v488, 0.6931472
    %v490 = vmul.f32 %v474, %v418
    %v491 = vmul.f32 %v475, %v419
    %v492 = vmul.f32 %v476, %v420
    %v493 = vmul.f32 %v477, %v421
    %v494 = vmul.f32 %v478, %v422
    %v495 = vmul.f32 %v479, %v423
    %v496 = vadd.f32 %v490, %v491
    %v497 = vadd.f32 %v496, %v492
    %498 = vadd.xlane.f32.xlu0 %v497
    %v499 = vpop.xlane.xlu0 %498
    %v500 = vadd.f32 %v493, %v494
    %v501 = vadd.f32 %v500, %v495
    %502 = vadd.xlane.f32.xlu0 %v501
    %v503 = vpop.xlane.xlu0 %502
    %v504 = vsub.f32 %v487, %v499
    %v505 = vsub.f32 %v489, %v503
    %v506 = vmul.f32 %v504, 1.442695
    %v507 = vpow.pop %v506
    %v508 = vmul.f32 %v505, 1.442695
    %v509 = vpow.pop %v508
    %v510 = vadd.f32 %v408, %v507
    %v511 = vadd.f32 %v409, %v509
    %v512 = vld [vmem:[#allocation2] sm:$0xff]
    %v513 = vld [vmem:[#allocation2 + $0x8] sm:$0xff]
    %v514 = vld [vmem:[#allocation2 + $0x10] sm:$0xff]
    %v515 = vld [vmem:[#allocation2 + $0x18] sm:$0xff]
    %v516 = vld [vmem:[#allocation2 + $0x20] sm:$0xff]
    %v517 = vld [vmem:[#allocation2 + $0x28] sm:$0xff]
    %v518 = vld [vmem:[#allocation2 + $0x30] sm:$0xff]
    %v519 = vld [vmem:[#allocation2 + $0x38] sm:$0xff]
    %v520 = vld [vmem:[#allocation2 + $0x40] sm:$0xff]
    %v521 = vld [vmem:[#allocation2 + $0x48] sm:$0xff]
    %v522 = vld [vmem:[#allocation2 + $0x50] sm:$0xff]
    %v523 = vld [vmem:[#allocation2 + $0x58] sm:$0xff]
    %v524 = vld [vmem:[#allocation11] sm:$0xff]
    %v525 = vld [vmem:[#allocation11 + $0x8] sm:$0xff]
    %v526 = vld [vmem:[#allocation11 + $0x10] sm:$0xff]
    %v527 = vld [vmem:[#allocation11 + $0x18] sm:$0xff]
    %v528 = vld [vmem:[#allocation11 + $0x20] sm:$0xff]
    %v529 = vld [vmem:[#allocation11 + $0x28] sm:$0xff]
    %v530 = vld [vmem:[#allocation11 + $0x30] sm:$0xff]
    %v531 = vld [vmem:[#allocation11 + $0x38] sm:$0xff]
    %v532 = vld [vmem:[#allocation11 + $0x40] sm:$0xff]
    %v533 = vld [vmem:[#allocation11 + $0x48] sm:$0xff]
    %v534 = vld [vmem:[#allocation11 + $0x50] sm:$0xff]
    %v535 = vld [vmem:[#allocation11 + $0x58] sm:$0xff]
    %v536 = vld [vmem:[#allocation11 + $0x60] sm:$0xff]
    %v537 = vld [vmem:[#allocation11 + $0x68] sm:$0xff]
    %v538 = vld [vmem:[#allocation11 + $0x70] sm:$0xff]
    %v539 = vld [vmem:[#allocation11 + $0x78] sm:$0xff]
    %v540 = vld [vmem:[#allocation11 + $0x80] sm:$0xff]
    %v541 = vld [vmem:[#allocation11 + $0x88] sm:$0xff]
    %v542 = vld [vmem:[#allocation11 + $0x90] sm:$0xff]
    %v543 = vld [vmem:[#allocation11 + $0x98] sm:$0xff]
    %v544 = vld [vmem:[#allocation11 + $0xa0] sm:$0xff]
    %v545 = vld [vmem:[#allocation11 + $0xa8] sm:$0xff]
    %v546 = vld [vmem:[#allocation11 + $0xb0] sm:$0xff]
    %v547 = vld [vmem:[#allocation11 + $0xb8] sm:$0xff]
    %v548 = vld [vmem:[#allocation11 + $0xc0] sm:$0xff]
    %v549 = vld [vmem:[#allocation11 + $0xc8] sm:$0xff]
    %v550 = vld [vmem:[#allocation11 + $0xd0] sm:$0xff]
    %v551 = vld [vmem:[#allocation11 + $0xd8] sm:$0xff]
    %v552 = vld [vmem:[#allocation11 + $0xe0] sm:$0xff]
    %v553 = vld [vmem:[#allocation11 + $0xe8] sm:$0xff]
    %v554 = vld [vmem:[#allocation11 + $0xf0] sm:$0xff]
    %v555 = vld [vmem:[#allocation11 + $0xf8] sm:$0xff]
    %v556 = vld [vmem:[#allocation11 + $0x100] sm:$0xff]
    %v557 = vld [vmem:[#allocation11 + $0x108] sm:$0xff]
    %v558 = vld [vmem:[#allocation11 + $0x110] sm:$0xff]
    %v559 = vld [vmem:[#allocation11 + $0x118] sm:$0xff]
    %v560 = vld [vmem:[#allocation11 + $0x120] sm:$0xff]
    %v561 = vld [vmem:[#allocation11 + $0x128] sm:$0xff]
    %v562 = vld [vmem:[#allocation11 + $0x130] sm:$0xff]
    %v563 = vld [vmem:[#allocation11 + $0x138] sm:$0xff]
    %v564 = vld [vmem:[#allocation11 + $0x140] sm:$0xff]
    %v565 = vld [vmem:[#allocation11 + $0x148] sm:$0xff]
    %v566 = vld [vmem:[#allocation11 + $0x150] sm:$0xff]
    %v567 = vld [vmem:[#allocation11 + $0x158] sm:$0xff]
    %v568 = vld [vmem:[#allocation11 + $0x160] sm:$0xff]
    %v569 = vld [vmem:[#allocation11 + $0x168] sm:$0xff]
    %v570 = vld [vmem:[#allocation11 + $0x170] sm:$0xff]
    %v571 = vld [vmem:[#allocation11 + $0x178] sm:$0xff]
    %v572 = vld [vmem:[#allocation11 + $0x180] sm:$0xff]
    %v573 = vld [vmem:[#allocation11 + $0x188] sm:$0xff]
    %v574 = vld [vmem:[#allocation11 + $0x190] sm:$0xff]
    %v575 = vld [vmem:[#allocation11 + $0x198] sm:$0xff]
    %v576 = vld [vmem:[#allocation11 + $0x1a0] sm:$0xff]
    %v577 = vld [vmem:[#allocation11 + $0x1a8] sm:$0xff]
    %v578 = vld [vmem:[#allocation11 + $0x1b0] sm:$0xff]
    %v579 = vld [vmem:[#allocation11 + $0x1b8] sm:$0xff]
    %v580 = vld [vmem:[#allocation11 + $0x1c0] sm:$0xff]
    %v581 = vld [vmem:[#allocation11 + $0x1c8] sm:$0xff]
    %v582 = vld [vmem:[#allocation11 + $0x1d0] sm:$0xff]
    %v583 = vld [vmem:[#allocation11 + $0x1d8] sm:$0xff]
    %v584 = vld [vmem:[#allocation11 + $0x1e0] sm:$0xff]
    %v585 = vld [vmem:[#allocation11 + $0x1e8] sm:$0xff]
    %v586 = vld [vmem:[#allocation11 + $0x1f0] sm:$0xff]
    %v587 = vld [vmem:[#allocation11 + $0x1f8] sm:$0xff]
    %v588 = vld [vmem:[#allocation11 + $0x200] sm:$0xff]
    %v589 = vld [vmem:[#allocation11 + $0x208] sm:$0xff]
    %v590 = vld [vmem:[#allocation11 + $0x210] sm:$0xff]
    %v591 = vld [vmem:[#allocation11 + $0x218] sm:$0xff]
    %v592 = vld [vmem:[#allocation11 + $0x220] sm:$0xff]
    %v593 = vld [vmem:[#allocation11 + $0x228] sm:$0xff]
    %v594 = vld [vmem:[#allocation11 + $0x230] sm:$0xff]
    %v595 = vld [vmem:[#allocation11 + $0x238] sm:$0xff]
    %v596 = vld [vmem:[#allocation11 + $0x240] sm:$0xff]
    %v597 = vld [vmem:[#allocation11 + $0x248] sm:$0xff]
    %v598 = vld [vmem:[#allocation11 + $0x250] sm:$0xff]
    %v599 = vld [vmem:[#allocation11 + $0x258] sm:$0xff]
    %v600 = vld [vmem:[#allocation11 + $0x260] sm:$0xff]
    %v601 = vld [vmem:[#allocation11 + $0x268] sm:$0xff]
    %v602 = vld [vmem:[#allocation11 + $0x270] sm:$0xff]
    %v603 = vld [vmem:[#allocation11 + $0x278] sm:$0xff]
    %v604 = vld [vmem:[#allocation11 + $0x280] sm:$0xff]
    %v605 = vld [vmem:[#allocation11 + $0x288] sm:$0xff]
    %v606 = vld [vmem:[#allocation11 + $0x290] sm:$0xff]
    %v607 = vld [vmem:[#allocation11 + $0x298] sm:$0xff]
    %v608 = vld [vmem:[#allocation11 + $0x2a0] sm:$0xff]
    %v609 = vld [vmem:[#allocation11 + $0x2a8] sm:$0xff]
    %v610 = vld [vmem:[#allocation11 + $0x2b0] sm:$0xff]
    %v611 = vld [vmem:[#allocation11 + $0x2b8] sm:$0xff]
    %v612 = vld [vmem:[#allocation11 + $0x2c0] sm:$0xff]
    %v613 = vld [vmem:[#allocation11 + $0x2c8] sm:$0xff]
    %v614 = vld [vmem:[#allocation11 + $0x2d0] sm:$0xff]
    %v615 = vld [vmem:[#allocation11 + $0x2d8] sm:$0xff]
    %v616 = vld [vmem:[#allocation11 + $0x2e0] sm:$0xff]
    %v617 = vld [vmem:[#allocation11 + $0x2e8] sm:$0xff]
    %v618 = vld [vmem:[#allocation11 + $0x2f0] sm:$0xff]
    %v619 = vld [vmem:[#allocation11 + $0x2f8] sm:$0xff]
    %620 = vmatpush.msra.mxu0 %v539
    %621 = vmatpush.msra.mxu0 %v538
    %622 = vmatpush.msra.mxu0 %v537
    %623 = vmatpush.msra.mxu0 %v536
    %624 = vmatpush.msra.mxu0 %v535
    %625 = vmatpush.msra.mxu0 %v534
    %626 = vmatpush.msra.mxu0 %v533
    %627 = vmatpush.msra.mxu0 %v532
    %628 = vmatpush.msra.mxu0 %v531
    %629 = vmatpush.msra.mxu0 %v530
    %630 = vmatpush.msra.mxu0 %v529
    %631 = vmatpush.msra.mxu0 %v528
    %632 = vmatpush.msra.mxu0 %v527
    %633 = vmatpush.msra.mxu0 %v526
    %634 = vmatpush.msra.mxu0 %v525
    %635 = vmatpush.msra.mxu0 %v524
    %636 = vmatmul.f32.gmra.mxu0 %v512
    %v637 = vpop.f32.mrf.mxu0
    %v638 = vadd.f32 0.0, %v637
    %639 = vmatmul.f32.gmra.mxu0 %v518
    %v640 = vpop.f32.mrf.mxu0
    %v641 = vadd.f32 0.0, %v640
    %642 = vdwg.mxu0
    %643 = vmatpush.msra.mxu0 %v555
    %644 = vmatpush.msra.mxu0 %v554
    %645 = vmatpush.msra.mxu0 %v553
    %646 = vmatpush.msra.mxu0 %v552
    %647 = vmatpush.msra.mxu0 %v551
    %648 = vmatpush.msra.mxu0 %v550
    %649 = vmatpush.msra.mxu0 %v549
    %650 = vmatpush.msra.mxu0 %v548
    %651 = vmatpush.msra.mxu0 %v547
    %652 = vmatpush.msra.mxu0 %v546
    %653 = vmatpush.msra.mxu0 %v545
    %654 = vmatpush.msra.mxu0 %v544
    %655 = vmatpush.msra.mxu0 %v543
    %656 = vmatpush.msra.mxu0 %v542
    %657 = vmatpush.msra.mxu0 %v541
    %658 = vmatpush.msra.mxu0 %v540
    %659 = vmatmul.f32.gmra.mxu0 %v513
    %v660 = vpop.f32.mrf.mxu0
    %v661 = vadd.f32 %v638, %v660
    %662 = vmatmul.f32.gmra.mxu0 %v519
    %v663 = vpop.f32.mrf.mxu0
    %v664 = vadd.f32 %v641, %v663
    %665 = vdwg.mxu0
    %666 = vmatpush.msra.mxu0 %v571
    %667 = vmatpush.msra.mxu0 %v570
    %668 = vmatpush.msra.mxu0 %v569
    %669 = vmatpush.msra.mxu0 %v568
    %670 = vmatpush.msra.mxu0 %v567
    %671 = vmatpush.msra.mxu0 %v566
    %672 = vmatpush.msra.mxu0 %v565
    %673 = vmatpush.msra.mxu0 %v564
    %674 = vmatpush.msra.mxu0 %v563
    %675 = vmatpush.msra.mxu0 %v562
    %676 = vmatpush.msra.mxu0 %v561
    %677 = vmatpush.msra.mxu0 %v560
    %678 = vmatpush.msra.mxu0 %v559
    %679 = vmatpush.msra.mxu0 %v558
    %680 = vmatpush.msra.mxu0 %v557
    %681 = vmatpush.msra.mxu0 %v556
    %682 = vmatmul.f32.gmra.mxu0 %v514
    %v683 = vpop.f32.mrf.mxu0
    %v684 = vadd.f32 %v661, %v683
    %685 = vmatmul.f32.gmra.mxu0 %v520
    %v686 = vpop.f32.mrf.mxu0
    %v687 = vadd.f32 %v664, %v686
    %688 = vdwg.mxu0
    %689 = vmatpush.msra.mxu0 %v587
    %690 = vmatpush.msra.mxu0 %v586
    %691 = vmatpush.msra.mxu0 %v585
    %692 = vmatpush.msra.mxu0 %v584
    %693 = vmatpush.msra.mxu0 %v583
    %694 = vmatpush.msra.mxu0 %v582
    %695 = vmatpush.msra.mxu0 %v581
    %696 = vmatpush.msra.mxu0 %v580
    %697 = vmatpush.msra.mxu0 %v579
    %698 = vmatpush.msra.mxu0 %v578
    %699 = vmatpush.msra.mxu0 %v577
    %700 = vmatpush.msra.mxu0 %v576
    %701 = vmatpush.msra.mxu0 %v575
    %702 = vmatpush.msra.mxu0 %v574
    %703 = vmatpush.msra.mxu0 %v573
    %704 = vmatpush.msra.mxu0 %v572
    %705 = vmatmul.f32.gmra.mxu0 %v515
    %v706 = vpop.f32.mrf.mxu0
    %v707 = vadd.f32 %v684, %v706
    %708 = vmatmul.f32.gmra.mxu0 %v521
    %v709 = vpop.f32.mrf.mxu0
    %v710 = vadd.f32 %v687, %v709
    %711 = vdwg.mxu0
    %712 = vmatpush.msra.mxu0 %v603
    %713 = vmatpush.msra.mxu0 %v602
    %714 = vmatpush.msra.mxu0 %v601
    %715 = vmatpush.msra.mxu0 %v600
    %716 = vmatpush.msra.mxu0 %v599
    %717 = vmatpush.msra.mxu0 %v598
    %718 = vmatpush.msra.mxu0 %v597
    %719 = vmatpush.msra.mxu0 %v596
    %720 = vmatpush.msra.mxu0 %v595
    %721 = vmatpush.msra.mxu0 %v594
    %722 = vmatpush.msra.mxu0 %v593
    %723 = vmatpush.msra.mxu0 %v592
    %724 = vmatpush.msra.mxu0 %v591
    %725 = vmatpush.msra.mxu0 %v590
    %726 = vmatpush.msra.mxu0 %v589
    %727 = vmatpush.msra.mxu0 %v588
    %728 = vmatmul.f32.gmra.mxu0 %v516
    %v729 = vpop.f32.mrf.mxu0
    %v730 = vadd.f32 %v707, %v729
    %731 = vmatmul.f32.gmra.mxu0 %v522
    %v732 = vpop.f32.mrf.mxu0
    %v733 = vadd.f32 %v710, %v732
    %734 = vdwg.mxu0
    %735 = vmatpush.msra.mxu0 %v619
    %736 = vmatpush.msra.mxu0 %v618
    %737 = vmatpush.msra.mxu0 %v617
    %738 = vmatpush.msra.mxu0 %v616
    %739 = vmatpush.msra.mxu0 %v615
    %740 = vmatpush.msra.mxu0 %v614
    %741 = vmatpush.msra.mxu0 %v613
    %742 = vmatpush.msra.mxu0 %v612
    %743 = vmatpush.msra.mxu0 %v611
    %744 = vmatpush.msra.mxu0 %v610
    %745 = vmatpush.msra.mxu0 %v609
    %746 = vmatpush.msra.mxu0 %v608
    %747 = vmatpush.msra.mxu0 %v607
    %748 = vmatpush.msra.mxu0 %v606
    %749 = vmatpush.msra.mxu0 %v605
    %750 = vmatpush.msra.mxu0 %v604
    %751 = vmatmul.f32.gmra.mxu0 %v517
    %v752 = vpop.f32.mrf.mxu0
    %v753 = vadd.f32 %v730, %v752
    %754 = vmatmul.f32.gmra.mxu0 %v523
    %v755 = vpop.f32.mrf.mxu0
    %v756 = vadd.f32 %v733, %v755
    %757 = vdwg.mxu0
    %758 = vst [vmem:[#allocation12] sm:$0xff] %v753
    %759 = vst [vmem:[#allocation12 + $0x8] sm:$0xff] %v756
    %vm760 = vcmask 7168
    %761 = vst.msk [vmem:[%s6] sm:$0xff] %vm760, %v510
    %762 = vst.msk [vmem:[%s6 + $0x8] sm:$0xff] %vm760, %v511
    // Predicated region
    $region42: #{tpu_custom_call.1} parent=1 // pred_check
      _
    $region43: #{tpu_custom_call.1} parent=1 // pred_check_branch
      %764 = sbr.rel (0) target = $region45
    $region44: #{tpu_custom_call.1} parent=1 // pred_region
      %766 = vsyncadd [#allocation5], 0
      %s767 = sshll.u32 [#allocation12], 4
      %s768 = int_to_ptr.vmem [resolvable:$true] %s767
      %s769 = sshll.u32 %s5, 4
      %s770 = int_to_ptr.hbm [resolvable:$true] %s769
      %775 = dma.vmem_to_hbm [thread:$0]  %s768, 256, %s770, [#allocation5], 128, 128, 8
    $region45: #{tpu_custom_call.1} parent=1 // pred_fallthru
      _
    // Predicated region
    $region46: #{tpu_custom_call.1} parent=1 // pred_check
      _
    $region47: #{tpu_custom_call.1} parent=1 // pred_check_branch
      %777 = sbr.rel (0) target = $region49
    $region48: #{tpu_custom_call.1} parent=1 // pred_region
      _
    $region49: #{tpu_custom_call.1} parent=1 // pred_fallthru
      _
    // Predicated region
    $region50: #{tpu_custom_call.1} parent=1 // pred_check
      _
    $region51: #{tpu_custom_call.1} parent=1 // pred_check_branch
      %779 = sbr.rel (0) target = $region53
    $region52: #{tpu_custom_call.1} parent=1 // pred_region
      %781 = dma.done [#allocation5], 256
    $region53: #{tpu_custom_call.1} parent=1 // pred_fallthru
      _
    // Predicated region
    $region54: #{tpu_custom_call.1} parent=1 // pred_check
      _
    $region55: #{tpu_custom_call.1} parent=1 // pred_check_branch
      %783 = sbr.rel (0) target = $region57
    $region56: #{tpu_custom_call.1} parent=1 // pred_region
      _
    $region57: #{tpu_custom_call.1} parent=1 // pred_fallthru
      _
    %784 = vsyncpa [#allocation4], 1
    %785 = vsyncpa [#allocation7], 1
    %786 = vsyncpa [#allocation10], 1
    %787 = vsyncpa [#allocation5], 1

</llo_original>
